<compile_context>
chip_gen: v6e
topology: v6e:2x2x1
jax: 0.10.0
libtpu: 0.0.40
codegen_flags: <defaults>
</compile_context>

<pallas_src>
import math

import jax
import jax.numpy as jnp
from jax.experimental import pallas as pl
from jax.experimental.pallas import tpu as pltpu

_MIB = 1024 * 1024
_DEFAULT_VMEM_CAPACITY = 128 * _MIB   # conservative fallback if query fails
_PALLAS_MIN_OUT_BYTES = 2 * _MIB      # below this, jnp.pad (fusable) wins


def _to_2tuple(v):
    if isinstance(v, (tuple, list)):
        assert len(v) == 2
        return tuple(v)
    return (v, v)


def _get_pad_shape(input_hw, kernel_size, stride, dilation):
    """Exact port of AdaptivePadding.get_pad_shape (static / Python-level)."""
    input_h, input_w = input_hw
    kernel_h, kernel_w = kernel_size
    stride_h, stride_w = stride
    dil_h, dil_w = dilation
    output_h = math.ceil(input_h / stride_h)
    output_w = math.ceil(input_w / stride_w)
    pad_h = max((output_h - 1) * stride_h + (kernel_h - 1) * dil_h + 1 - input_h, 0)
    pad_w = max((output_w - 1) * stride_w + (kernel_w - 1) * dil_w + 1 - input_w, 0)
    return pad_h, pad_w


def _padded_slice_bytes(h, w, dtype):
    """VMEM footprint of one (h, w) slice after (sublane, 128-lane) padding."""
    itemsize = jnp.dtype(dtype).itemsize
    sublane = max(1, (8 * 4) // itemsize)          # 8 for f32, 16 for bf16, ...
    hp = -(-h // sublane) * sublane
    wp = -(-w // 128) * 128
    return hp * wp * itemsize


def _vmem_plan(pair_bytes):
    """Generation-aware (max_rows, vmem_limit_bytes) for double-buffered tiles.

    `pair_bytes` is the VMEM footprint of ONE leading row's (input tile +
    output tile).  Double-buffering doubles the resident footprint, so the
    per-copy budget is half of the tile budget.
    """
    cap = _DEFAULT_VMEM_CAPACITY
    try:
        info = pltpu.get_tpu_info()
        cap = int(getattr(info, "vmem_capacity_bytes", cap)) or cap
    except Exception:
        pass  # interpret mode / older jax: keep the conservative default
    # 64 MiB scoped limit on 128 MiB chips (v5e/v6e), 32 MiB on 64 MiB (v7x).
    vmem_limit = max(16 * _MIB, min(cap // 2, 64 * _MIB))
    tile_budget = (vmem_limit * 3) // 4            # 25% headroom under the limit
    max_rows = max(1, tile_budget // (2 * pair_bytes))
    # Even a single-row double-buffered pair doesn't fit: grow the limit
    # (up to near physical capacity) rather than failing at compile time.
    if 2 * pair_bytes > tile_budget:
        needed = 2 * pair_bytes + 4 * _MIB
        vmem_limit = max(vmem_limit, min(needed, max(cap - 8 * _MIB, vmem_limit)))
    return max_rows, int(vmem_limit)


def _make_pad_kernel(top, left, H, W, pad_h, pad_w):
    """Kernel: one store of the interior + zero stores for the margins only."""
    bottom = pad_h - top
    right = pad_w - left
    W_out = W + pad_w

    def pad_kernel(x_ref, o_ref):
        nt = o_ref.shape[0]
        dt = o_ref.dtype
        # Interior data: written exactly once at its (static) offset.
        o_ref[:, pl.ds(top, H), pl.ds(left, W)] = x_ref[...]
        # Zero only the pad margins (each output element is written once).
        if top:
            o_ref[:, pl.ds(0, top), :] = jnp.zeros((nt, top, W_out), dt)
        if bottom:
            o_ref[:, pl.ds(top + H, bottom), :] = jnp.zeros((nt, bottom, W_out), dt)
        if left:
            o_ref[:, pl.ds(top, H), pl.ds(0, left)] = jnp.zeros((nt, H, left), dt)
        if right:
            o_ref[:, pl.ds(top, H), pl.ds(left + W, right)] = jnp.zeros((nt, H, right), dt)

    return pad_kernel


def adaptive_padding(x, kernel_size=1, stride=1, dilation=1, padding='corner',
                     use_pallas=None, block_rows=None):
    """JAX/Pallas equivalent of AdaptivePadding.forward for NCHW `x`.

    use_pallas: None = auto (size threshold); True/False force the path.
    block_rows: optional override of the leading-axis tile size (testing).
    """
    assert padding in ('same', 'corner')
    kernel_size = _to_2tuple(kernel_size)
    stride = _to_2tuple(stride)
    dilation = _to_2tuple(dilation)

    B, C, H, W = x.shape
    pad_h, pad_w = _get_pad_shape((H, W), kernel_size, stride, dilation)

    if pad_h == 0 and pad_w == 0:
        return x  # PyTorch returns the input unchanged in this case.

    if padding == 'corner':
        top, left = 0, 0
    else:  # 'same'
        top, left = pad_h // 2, pad_w // 2

    H_out, W_out = H + pad_h, W + pad_w
    itemsize = jnp.dtype(x.dtype).itemsize

    # Small inputs: XLA's pad is roofline for a pure copy and fuses downstream;
    # the standalone kernel only pays off once HBM traffic dominates overhead.
    if use_pallas is None:
        use_pallas = (B * C * H_out * W_out * itemsize) >= _PALLAS_MIN_OUT_BYTES
    if not use_pallas:
        pads = ((0, 0), (0, 0), (top, pad_h - top), (left, pad_w - left))
        return jnp.pad(x, pads)

    # Collapse (B, C) into one leading axis: bigger tiles / DMAs, fewer grid
    # steps.  Free reshape (leading-dim merge, row-major).
    N = B * C
    x3 = x.reshape(N, H, W)

    in_slice = _padded_slice_bytes(H, W, x.dtype)
    out_slice = _padded_slice_bytes(H_out, W_out, x.dtype)
    max_rows, vmem_limit = _vmem_plan(in_slice + out_slice)
    if block_rows is not None:
        nt = max(1, min(int(block_rows), N))
    else:
        nt = min(N, max_rows)
    # cdiv grid: nt need not divide N; Pallas masks the ragged trailing block.
    grid = (pl.cdiv(N, nt),)

    cost = pl.CostEstimate(
        flops=0,
        transcendentals=0,
        bytes_accessed=(N * H * W + N * H_out * W_out) * itemsize)

    kernel = _make_pad_kernel(top, left, H, W, pad_h, pad_w)

    out3 = pl.pallas_call(
        kernel,
        out_shape=jax.ShapeDtypeStruct((N, H_out, W_out), x.dtype),
        grid_spec=pltpu.PrefetchScalarGridSpec(
            num_scalar_prefetch=0,
            grid=grid,
            in_specs=[pl.BlockSpec((nt, H, W), lambda n: (n, 0, 0))],
            out_specs=pl.BlockSpec((nt, H_out, W_out), lambda n: (n, 0, 0)),
        ),
        compiler_params=pltpu.CompilerParams(
            dimension_semantics=("parallel",),
            vmem_limit_bytes=vmem_limit),
        cost_estimate=cost,
    )(x3)

    return out3.reshape(B, C, H_out, W_out)


def _reference_adaptive_padding(x, kernel_size, stride, dilation, padding):
    """Pure-JAX reference (mirrors F.pad semantics in the PyTorch module)."""
    kernel_size = _to_2tuple(kernel_size)
    stride = _to_2tuple(stride)
    dilation = _to_2tuple(dilation)
    H, W = x.shape[-2:]
    pad_h, pad_w = _get_pad_shape((H, W), kernel_size, stride, dilation)
    if pad_h == 0 and pad_w == 0:
        return x
    if padding == 'corner':
        pads = ((0, 0), (0, 0), (0, pad_h), (0, pad_w))
    else:
        pads = ((0, 0), (0, 0),
                (pad_h // 2, pad_h - pad_h // 2),
                (pad_w // 2, pad_w - pad_w // 2))
    return jnp.pad(x, pads)


if __name__ == "__main__":
    key = jax.random.PRNGKey(0)
    # Matches the module's docstring regime: (B, C, H, W) with H, W not
    # divisible by the patch size, so padding is required.
    B, C, H, W = 2, 4, 15, 17
    kernel_size, stride, dilation = 16, 16, 1

    x = jax.random.normal(key, (B, C, H, W), dtype=jnp.float32)

    # Force the Pallas path (the auto-dispatch would use jnp.pad at this size).
    for mode in ("corner", "same"):
        out = adaptive_padding(x, kernel_size=kernel_size, stride=stride,
                               dilation=dilation, padding=mode, use_pallas=True)
        out = jax.block_until_ready(out)
        ref = _reference_adaptive_padding(x, kernel_size, stride, dilation, mode)
        assert out.shape == (B, C, 16, 32), out.shape
        assert out.dtype == x.dtype
        assert jnp.array_equal(out, ref), f"mismatch in mode={mode}"

    # Ragged trailing block: N = 3*5 = 15 with block_rows=4 -> grid = cdiv(15,4)=4,
    # last block only partially in-bounds (relies on Pallas masking OOB rows).
    key_r = jax.random.split(key)[0]
    x_r = jax.random.normal(key_r, (3, 5, 15, 17), dtype=jnp.float32)
    out_r = jax.block_until_ready(
        adaptive_padding(x_r, kernel_size=kernel_size, stride=stride,
                         dilation=dilation, padding="same",
                         use_pallas=True, block_rows=4))
    ref_r = _reference_adaptive_padding(x_r, kernel_size, stride, dilation, "same")
    assert out_r.shape == ref_r.shape and jnp.array_equal(out_r, ref_r)

    # Auto-dispatch path for small inputs (jnp.pad) stays correct.
    out_a = jax.block_until_ready(
        adaptive_padding(x, kernel_size=kernel_size, stride=stride,
                         dilation=dilation, padding="corner"))
    assert jnp.array_equal(
        out_a, _reference_adaptive_padding(x, kernel_size, stride, dilation, "corner"))

    # No-padding path (returns input unchanged).
    x2 = jax.random.normal(key, (B, C, 16, 32), dtype=jnp.float32)
    out2 = jax.block_until_ready(
        adaptive_padding(x2, kernel_size=kernel_size, stride=stride,
                         dilation=dilation, padding="corner", use_pallas=True))
    assert out2.shape == x2.shape and jnp.array_equal(out2, x2)

    print("KERNEL_OK")
</pallas_src>

<mosaic_0001>
module attributes {stable_mosaic.version = 11 : i64} {
  func.func @pad_kernel(%arg0: i32, %arg1: memref<8x15x17xf32, #tpu.memory_space<vmem>>, %arg2: memref<8x16x32xf32, #tpu.memory_space<vmem>>) attributes {dimension_semantics = [#tpu.dimension_semantics<parallel>], iteration_bounds = array<i64: 1>, scalar_prefetch = 0 : i64, scratch_operands = 0 : i64, tpu.core_type = #tpu.core_type<tc>, window_params = [{transform_indices = @transform_0, window_bounds = array<i64: 8, 15, 17>}, {transform_indices = @transform_1, window_bounds = array<i64: 8, 16, 32>}]} {
    %c0 = arith.constant 0 : index
    %c0_0 = arith.constant 0 : index
    %c0_1 = arith.constant 0 : index
    %0 = vector.load %arg1[%c0, %c0_0, %c0_1] : memref<8x15x17xf32, #tpu.memory_space<vmem>>, vector<8x15x17xf32>
    %c0_2 = arith.constant 0 : index
    %c0_3 = arith.constant 0 : index
    %c0_4 = arith.constant 0 : index
    %1 = vector.load %arg2[%c0_2, %c0_3, %c0_4] : memref<8x16x32xf32, #tpu.memory_space<vmem>>, vector<8x15x17xf32>
    tpu.vector_store %arg2[%c0_2, %c0_3, %c0_4], %0 {strides = array<i32>} : memref<8x16x32xf32, #tpu.memory_space<vmem>>, vector<8x15x17xf32>,
    %cst = arith.constant 0.000000e+00 : f32
    %2 = vector.broadcast %cst : f32 to vector<8x1x32xf32>
    %c0_5 = arith.constant 0 : index
    %c15 = arith.constant 15 : index
    %c0_6 = arith.constant 0 : index
    %3 = vector.load %arg2[%c0_5, %c15, %c0_6] : memref<8x16x32xf32, #tpu.memory_space<vmem>>, vector<8x1x32xf32>
    tpu.vector_store %arg2[%c0_5, %c15, %c0_6], %2 {strides = array<i32>} : memref<8x16x32xf32, #tpu.memory_space<vmem>>, vector<8x1x32xf32>,
    %cst_7 = arith.constant 0.000000e+00 : f32
    %4 = vector.broadcast %cst_7 : f32 to vector<8x15x15xf32>
    %c0_8 = arith.constant 0 : index
    %c0_9 = arith.constant 0 : index
    %c17 = arith.constant 17 : index
    %5 = vector.load %arg2[%c0_8, %c0_9, %c17] : memref<8x16x32xf32, #tpu.memory_space<vmem>>, vector<8x15x15xf32>
    tpu.vector_store %arg2[%c0_8, %c0_9, %c17], %4 {strides = array<i32>} : memref<8x16x32xf32, #tpu.memory_space<vmem>>, vector<8x15x15xf32>,
    return
  }
  func.func @transform_0(%arg0: i32) -> (i32, i32, i32) {
    %c0_i32 = arith.constant 0 : i32
    %c0_i32_0 = arith.constant 0 : i32
    %c0_i32_1 = arith.constant 0 : i32
    return %arg0, %c0_i32, %c0_i32_0 : i32, i32, i32
  }
  func.func @transform_1(%arg0: i32) -> (i32, i32, i32) {
    %c0_i32 = arith.constant 0 : i32
    %c0_i32_0 = arith.constant 0 : i32
    %c0_i32_1 = arith.constant 0 : i32
    return %arg0, %c0_i32, %c0_i32_0 : i32, i32, i32
  }
}

</mosaic_0001>

<llo_original>
// kernel: tpu_custom_call.1
$region0: #{tpu_custom_call.1}
  #allocation0 [shape = 'u32[]', space=smem, size = 0x4, offset = 0x4, fixed_abs, tag = 'smem constant byte address 0x4 - core index']
  #allocation1 [shape = 'u32[144,128]{1,0:T(1,128)}', space=vmem, size = 0x12000, scoped, tag = 'internal scratch']
  %s0 = inlined_call_operand.vmem [shape: f32[8,15,17], index: 0, kind: input, shape index: {}]
  %s1 = inlined_call_operand.hbm [shape: f32[8,16,32], index: 1, kind: output, shape index: {}]
  %s2 = sld [smem:[#allocation0]]
  $region14: #{tpu_custom_call.1} parent=0
    _
  %s4 = ssub.s32 1, %s2
  %s5 = scalar_select 0, %s4, %s2
  $region1: #{tpu_custom_call.1} parent=0
    #allocation2 [shape = 'u8[65536]{0}', space=vmem, size = 0x10000, scoped, tag = 'output window, operand 0, single buffered']
    #allocation3 [shape = 's32[1]{0}', space=sflag, size = 0x4, scoped, tag = 'scoped memory for tpu_custom_call.1']
    %6 = vsyncpa [#allocation3], 0
    // Predicated region
    $region2: #{tpu_custom_call.1} parent=1 // pred_check
      _
    $region3: #{tpu_custom_call.1} parent=1 // pred_check_branch
      %8 = sbr.rel (0) target = $region5
    $region4: #{tpu_custom_call.1} parent=1 // pred_region
      _
    $region5: #{tpu_custom_call.1} parent=1 // pred_fallthru
      _
    %v9 = vld [vmem:[%s0] sm:$0xff]
    %v10 = vld [vmem:[%s0 + $0x8] sm:$0x7f]
    %v11 = vld [vmem:[%s0 + $0x10] sm:$0xff]
    %v12 = vld [vmem:[%s0 + $0x18] sm:$0x7f]
    %v13 = vld [vmem:[%s0 + $0x20] sm:$0xff]
    %v14 = vld [vmem:[%s0 + $0x28] sm:$0x7f]
    %v15 = vld [vmem:[%s0 + $0x30] sm:$0xff]
    %v16 = vld [vmem:[%s0 + $0x38] sm:$0x7f]
    %v17 = vld [vmem:[%s0 + $0x40] sm:$0xff]
    %v18 = vld [vmem:[%s0 + $0x48] sm:$0x7f]
    %v19 = vld [vmem:[%s0 + $0x50] sm:$0xff]
    %v20 = vld [vmem:[%s0 + $0x58] sm:$0x7f]
    %v21 = vld [vmem:[%s0 + $0x60] sm:$0xff]
    %v22 = vld [vmem:[%s0 + $0x68] sm:$0x7f]
    %v23 = vld [vmem:[%s0 + $0x70] sm:$0xff]
    %v24 = vld [vmem:[%s0 + $0x78] sm:$0x7f]
    %vm25 = vcmask 138240
    %26 = vst.msk [vmem:[#allocation2] sm:$0xff] %vm25, %v9
    %vm27 = vcmask 137216
    %28 = vst.msk [vmem:[#allocation2 + $0x8] sm:$0x7f] %vm27, %v10
    %29 = vst.msk [vmem:[#allocation2 + $0x10] sm:$0xff] %vm25, %v11
    %30 = vst.msk [vmem:[#allocation2 + $0x18] sm:$0x7f] %vm27, %v12
    %31 = vst.msk [vmem:[#allocation2 + $0x20] sm:$0xff] %vm25, %v13
    %32 = vst.msk [vmem:[#allocation2 + $0x28] sm:$0x7f] %vm27, %v14
    %33 = vst.msk [vmem:[#allocation2 + $0x30] sm:$0xff] %vm25, %v15
    %34 = vst.msk [vmem:[#allocation2 + $0x38] sm:$0x7f] %vm27, %v16
    %35 = vst.msk [vmem:[#allocation2 + $0x40] sm:$0xff] %vm25, %v17
    %36 = vst.msk [vmem:[#allocation2 + $0x48] sm:$0x7f] %vm27, %v18
    %37 = vst.msk [vmem:[#allocation2 + $0x50] sm:$0xff] %vm25, %v19
    %38 = vst.msk [vmem:[#allocation2 + $0x58] sm:$0x7f] %vm27, %v20
    %39 = vst.msk [vmem:[#allocation2 + $0x60] sm:$0xff] %vm25, %v21
    %40 = vst.msk [vmem:[#allocation2 + $0x68] sm:$0x7f] %vm27, %v22
    %41 = vst.msk [vmem:[#allocation2 + $0x70] sm:$0xff] %vm25, %v23
    %42 = vst.msk [vmem:[#allocation2 + $0x78] sm:$0x7f] %vm27, %v24
    %vm43 = vcmask 253952
    %44 = vst.msk [vmem:[#allocation2 + $0xf] sm:$0x1] %vm43, 0.0
    %45 = vst.msk [vmem:[#allocation2 + $0x1f] sm:$0x1] %vm43, 0.0
    %46 = vst.msk [vmem:[#allocation2 + $0x2f] sm:$0x1] %vm43, 0.0
    %47 = vst.msk [vmem:[#allocation2 + $0x3f] sm:$0x1] %vm43, 0.0
    %48 = vst.msk [vmem:[#allocation2 + $0x4f] sm:$0x1] %vm43, 0.0
    %49 = vst.msk [vmem:[#allocation2 + $0x5f] sm:$0x1] %vm43, 0.0
    %50 = vst.msk [vmem:[#allocation2 + $0x6f] sm:$0x1] %vm43, 0.0
    %51 = vst.msk [vmem:[#allocation2 + $0x7f] sm:$0x1] %vm43, 0.0
    %vm52 = vcmask 261256
    %53 = vst.msk [vmem:[#allocation2] sm:$0xff] %vm52, 0.0
    %vm54 = vcmask 260232
    %55 = vst.msk [vmem:[#allocation2 + $0x8] sm:$0x7f] %vm54, 0.0
    %56 = vst.msk [vmem:[#allocation2 + $0x10] sm:$0xff] %vm52, 0.0
    %57 = vst.msk [vmem:[#allocation2 + $0x18] sm:$0x7f] %vm54, 0.0
    %58 = vst.msk [vmem:[#allocation2 + $0x20] sm:$0xff] %vm52, 0.0
    %59 = vst.msk [vmem:[#allocation2 + $0x28] sm:$0x7f] %vm54, 0.0
    %60 = vst.msk [vmem:[#allocation2 + $0x30] sm:$0xff] %vm52, 0.0
    %61 = vst.msk [vmem:[#allocation2 + $0x38] sm:$0x7f] %vm54, 0.0
    %62 = vst.msk [vmem:[#allocation2 + $0x40] sm:$0xff] %vm52, 0.0
    %63 = vst.msk [vmem:[#allocation2 + $0x48] sm:$0x7f] %vm54, 0.0
    %64 = vst.msk [vmem:[#allocation2 + $0x50] sm:$0xff] %vm52, 0.0
    %65 = vst.msk [vmem:[#allocation2 + $0x58] sm:$0x7f] %vm54, 0.0
    %66 = vst.msk [vmem:[#allocation2 + $0x60] sm:$0xff] %vm52, 0.0
    %67 = vst.msk [vmem:[#allocation2 + $0x68] sm:$0x7f] %vm54, 0.0
    %68 = vst.msk [vmem:[#allocation2 + $0x70] sm:$0xff] %vm52, 0.0
    %69 = vst.msk [vmem:[#allocation2 + $0x78] sm:$0x7f] %vm54, 0.0
    // Predicated region
    $region6: #{tpu_custom_call.1} parent=1 // pred_check
      _
    $region7: #{tpu_custom_call.1} parent=1 // pred_check_branch
      %71 = sbr.rel (0) target = $region9
    $region8: #{tpu_custom_call.1} parent=1 // pred_region
      %s73 = ssub.s32 2048, 2048
      %74 = vsyncadd [#allocation3], %s73
      %s75 = sshll.u32 [#allocation2], 4
      %s76 = int_to_ptr.vmem [resolvable:$true] %s75
      %81 = dma.vmem_to_hbm [thread:$0]  %s76, 2048, %s1, [#allocation3], 128, 128, 8
    $region9: #{tpu_custom_call.1} parent=1 // pred_fallthru
      _
    // Predicated region
    $region10: #{tpu_custom_call.1} parent=1 // pred_check
      _
    $region11: #{tpu_custom_call.1} parent=1 // pred_check_branch
      %83 = sbr.rel (0) target = $region13
    $region12: #{tpu_custom_call.1} parent=1 // pred_region
      %84 = dma.done [#allocation3], 2048
    $region13: #{tpu_custom_call.1} parent=1 // pred_fallthru
      _
    %85 = vsyncpa [#allocation3], 1

</llo_original>
